<compile_context>
chip_gen: v5e
topology: v5e:2x2
jax: 0.10.0
libtpu: 0.0.40
codegen_flags: <defaults>
</compile_context>

<pallas_src>
import jax
import jax.numpy as jnp
from jax.experimental import pallas as pl
from jax.experimental.pallas import tpu as pltpu

HIDDEN = 100  # same as the PyTorch module


def _round_up(n, m):
    return ((n + m - 1) // m) * m


def _pad2(a, rows, cols):
    """Zero-pad a 2-D array up to (rows, cols)."""
    return jnp.pad(a, ((0, rows - a.shape[0]), (0, cols - a.shape[1])))


def _detect_tpu():
    """Best-effort chip detection -> (tensorcores_per_device, preferred compute dtype)."""
    try:
        kind = jax.devices()[0].device_kind.lower()
    except Exception:  # pragma: no cover - CPU/interpret fallbacks
        kind = ""
    if "v7" in kind:
        return 2, jnp.bfloat16      # 2 TC/chip, bf16-native 2x256^2 MXU
    if "v6" in kind:
        return 1, jnp.bfloat16      # 1 TC/chip, bf16-native 2x256^2 MXU
    return 1, jnp.float32           # v5e & unknown: 1 TC, keep f32 (no bf16 VPU)


# --------------------------------------------------------------------------------------
# Kernel: entire hot path (3 matmuls + biases + ReLUs) fused, weights resident in VMEM.
# --------------------------------------------------------------------------------------
def _mlp_kernel(x_ref, w1_ref, b1_ref, w2_ref, b2_ref, w3_ref, b3_ref, o_ref):
    wdt = w1_ref.dtype  # matmul operand dtype (f32 or bf16); accumulation is always f32
    x = x_ref[...].astype(wdt)

    h1 = jnp.dot(x, w1_ref[...], preferred_element_type=jnp.float32) + b1_ref[...]
    h1 = jnp.maximum(h1, 0.0)

    h2 = jnp.dot(h1.astype(wdt), w2_ref[...], preferred_element_type=jnp.float32) + b2_ref[...]
    h2 = jnp.maximum(h2, 0.0)

    out = jnp.dot(h2.astype(wdt), w3_ref[...], preferred_element_type=jnp.float32) + b3_ref[...]
    o_ref[...] = out.astype(o_ref.dtype)


# --------------------------------------------------------------------------------------
# One-time parameter preparation (pad + cast, cached by the caller).
# --------------------------------------------------------------------------------------
def prepare_params(params, *, compute_dtype=None):
    """Pad + cast PyTorch-shaped params (W: (in, out), b: (1, out)) ONCE.

    Padding: in_dim -> multiple of 8 (sublane-native x DMA / w1 layout),
             hidden & out_dim -> multiples of 128 (lane-dense matmuls, unmasked stores).
    Returns (padded_param_tuple, static_metadata_dict).
    """
    if compute_dtype is None:
        _, compute_dtype = _detect_tpu()

    w1, b1, w2, b2, w3, b3 = params
    in_dim, hidden = w1.shape
    out_dim = w3.shape[1]

    in_p = _round_up(in_dim, 8)
    hid_p = _round_up(hidden, 128)
    out_p = _round_up(out_dim, 128)

    padded = (
        _pad2(w1, in_p, hid_p).astype(compute_dtype),
        _pad2(b1, 1, hid_p).astype(jnp.float32),     # biases stay f32 (added to f32 acc)
        _pad2(w2, hid_p, hid_p).astype(compute_dtype),
        _pad2(b2, 1, hid_p).astype(jnp.float32),
        _pad2(w3, hid_p, out_p).astype(compute_dtype),
        _pad2(b3, 1, out_p).astype(jnp.float32),
    )
    meta = dict(in_dim=in_dim, in_p=in_p, hid_p=hid_p, out_dim=out_dim, out_p=out_p)
    return padded, meta


# --------------------------------------------------------------------------------------
# Batch-tile selection (generation-aware).
# --------------------------------------------------------------------------------------
def _choose_batch_tile(batch, num_tensorcores, m_align, max_tile_rows):
    b8 = _round_up(batch, 8)
    if num_tensorcores >= 2:
        # Exactly num_tc parallel grid steps (both v7x TCs busy, no extra serial steps).
        per_core = -(-b8 // num_tensorcores)
        bt = _round_up(per_core, m_align) if per_core >= m_align else _round_up(per_core, 8)
    else:
        # Single TC: one grid step covering the whole padded batch (steps are serial).
        bt = _round_up(b8, m_align) if b8 >= m_align else b8
    bt = min(_round_up(bt, 8), _round_up(max_tile_rows, 8))
    return max(bt, 8)


# --------------------------------------------------------------------------------------
# Forward pass.
# --------------------------------------------------------------------------------------
def network_forward(x, prepared, *, num_tensorcores=None, max_tile_rows=2048,
                    return_padded=False):
    """Run the 3-layer MLP.  x: (B, in_dim) float32; prepared = prepare_params(...)."""
    padded_params, meta = prepared
    w1p, b1p, w2p, b2p, w3p, b3p = padded_params
    in_dim, in_p = meta["in_dim"], meta["in_p"]
    hid_p, out_dim, out_p = meta["hid_p"], meta["out_dim"], meta["out_p"]

    assert x.ndim == 2 and x.shape[1] == in_dim, "x must be (B, in_dim)"
    B = x.shape[0]

    if num_tensorcores is None:
        num_tensorcores, _ = _detect_tpu()

    # MXU M granularity: 256 rows for bf16 (v6e/v7x 2x256^2), 128 for f32 (v5e 4x128^2).
    m_align = 256 if w1p.dtype == jnp.bfloat16 else 128
    bt = _choose_batch_tile(B, num_tensorcores, m_align, max_tile_rows)
    B_p = _round_up(B, bt)

    # Pad batch rows (to a tile multiple) and feature columns (to in_p) in one cheap op.
    if B_p != B or in_p != in_dim:
        x = jnp.pad(x, ((0, B_p - B), (0, in_p - in_dim)))

    grid = (B_p // bt,)

    # Weights/biases: full (padded) tensors, constant index_map -> not re-DMA'd per step.
    def full_spec(arr):
        return pl.BlockSpec(arr.shape, lambda i: (0, 0))

    # Rough per-step VMEM footprint: double-buffered x & out tiles, f32 h1/h2, bf16 copies,
    # double-buffered params.  Only override scoped VMEM if it would be tight (>12 MiB);
    # at the default 2048-row cap this is ~6 MiB and stays on the compiler default.
    param_bytes = sum(int(a.size) * a.dtype.itemsize for a in padded_params)
    row_bytes = (2 * in_p + 4 * out_p + 2 * hid_p) * 4 + (in_p + 2 * hid_p) * 2
    est = bt * row_bytes + 2 * param_bytes
    vmem_limit_bytes = int(est * 3 // 2) if est > 12 * 1024 * 1024 else None

    out = pl.pallas_call(
        _mlp_kernel,
        out_shape=jax.ShapeDtypeStruct((B_p, out_p), jnp.float32),
        grid_spec=pltpu.PrefetchScalarGridSpec(
            num_scalar_prefetch=0,
            grid=grid,
            in_specs=[
                pl.BlockSpec((bt, in_p), lambda i: (i, 0)),   # x tile
                full_spec(w1p), full_spec(b1p),
                full_spec(w2p), full_spec(b2p),
                full_spec(w3p), full_spec(b3p),
            ],
            out_specs=pl.BlockSpec((bt, out_p), lambda i: (i, 0)),
        ),
        compiler_params=pltpu.CompilerParams(
            dimension_semantics=("parallel",),
            vmem_limit_bytes=vmem_limit_bytes,
        ),
    )(x, w1p, b1p, w2p, b2p, w3p, b3p)

    if return_padded:
        return out  # (B_p, out_p); caller handles the slice / consumes padded lanes
    return out[:B, :out_dim]


# --------------------------------------------------------------------------------------
# Init + pure-JAX reference.
# --------------------------------------------------------------------------------------
def init_params(key, input_dimension, output_dimension):
    """Deterministic init mimicking torch.nn.Linear defaults (uniform +-1/sqrt(fan_in))."""
    ks = jax.random.split(key, 6)

    def lin(kw, kb, fan_in, fan_out):
        bound = 1.0 / jnp.sqrt(jnp.float32(fan_in))
        w = jax.random.uniform(kw, (fan_in, fan_out), jnp.float32, -bound, bound)
        b = jax.random.uniform(kb, (1, fan_out), jnp.float32, -bound, bound)
        return w, b

    w1, b1 = lin(ks[0], ks[1], input_dimension, HIDDEN)
    w2, b2 = lin(ks[2], ks[3], HIDDEN, HIDDEN)
    w3, b3 = lin(ks[4], ks[5], HIDDEN, output_dimension)
    return (w1, b1, w2, b2, w3, b3)


def network_forward_ref(x, params):
    w1, b1, w2, b2, w3, b3 = params
    h1 = jnp.maximum(x @ w1 + b1, 0.0)
    h2 = jnp.maximum(h1 @ w2 + b2, 0.0)
    return h2 @ w3 + b3


if __name__ == "__main__":
    key = jax.random.PRNGKey(0)
    k_param, k_x, k_x2 = jax.random.split(key, 3)

    input_dimension = 4   # e.g. RL state dimension
    output_dimension = 4  # e.g. number of discrete actions
    params = init_params(k_param, input_dimension, output_dimension)

    # One-time preparation (cached); f32 path for tight numerical checks,
    # hardware-default path (bf16 on v6e/v7x, f32 on v5e) for the production config.
    prepared_f32 = prepare_params(params, compute_dtype=jnp.float32)
    prepared_auto = prepare_params(params)  # compute dtype chosen from the chip

    fwd_f32 = jax.jit(lambda xx: network_forward(xx, prepared_f32))
    fwd_auto = jax.jit(lambda xx: network_forward(xx, prepared_auto))

    # Small main case.
    B = 64
    x = jax.random.normal(k_x, (B, input_dimension), jnp.float32)
    ref = network_forward_ref(x, params)

    out = jax.block_until_ready(fwd_f32(x))
    assert out.shape == (B, output_dimension)
    assert jnp.allclose(out, ref, atol=1e-4, rtol=1e-4), "mismatch vs JAX reference (f32)"

    # Hardware-default compute dtype (bf16 on v6e/v7x -> looser tolerance).
    out_auto = jax.block_until_ready(fwd_auto(x))
    assert out_auto.shape == (B, output_dimension)
    if prepared_auto[0][0].dtype == jnp.bfloat16:
        assert jnp.allclose(out_auto, ref, atol=1e-1, rtol=1e-1), "mismatch (bf16 auto)"
    else:
        assert jnp.allclose(out_auto, ref, atol=1e-4, rtol=1e-4), "mismatch (f32 auto)"

    # Ragged batch (not a multiple of 8 / of the tile): exercises pad-and-slice path.
    B2 = 10
    x2 = jax.random.normal(k_x2, (B2, input_dimension), jnp.float32)
    out2 = jax.block_until_ready(fwd_f32(x2))
    ref2 = network_forward_ref(x2, params)
    assert out2.shape == (B2, output_dimension)
    assert jnp.allclose(out2, ref2, atol=1e-4, rtol=1e-4), "mismatch vs JAX reference (ragged)"

    print("KERNEL_OK")
</pallas_src>

<mosaic_0001>
module attributes {stable_mosaic.version = 11 : i64} {
  func.func @_mlp_kernel(%arg0: i32, %arg1: memref<64x8xf32, #tpu.memory_space<vmem>>, %arg2: memref<8x128xf32, #tpu.memory_space<vmem>>, %arg3: memref<1x128xf32, #tpu.memory_space<vmem>>, %arg4: memref<128x128xf32, #tpu.memory_space<vmem>>, %arg5: memref<1x128xf32, #tpu.memory_space<vmem>>, %arg6: memref<128x128xf32, #tpu.memory_space<vmem>>, %arg7: memref<1x128xf32, #tpu.memory_space<vmem>>, %arg8: memref<64x128xf32, #tpu.memory_space<vmem>>) attributes {dimension_semantics = [#tpu.dimension_semantics<parallel>], iteration_bounds = array<i64: 1>, scalar_prefetch = 0 : i64, scratch_operands = 0 : i64, tpu.core_type = #tpu.core_type<tc>, window_params = [{transform_indices = @transform_0, window_bounds = array<i64: 64, 8>}, {pipeline_mode = #tpu.pipeline_mode<synchronous>, transform_indices = @transform_1, window_bounds = array<i64: 8, 128>}, {pipeline_mode = #tpu.pipeline_mode<synchronous>, transform_indices = @transform_2, window_bounds = array<i64: 1, 128>}, {pipeline_mode = #tpu.pipeline_mode<synchronous>, transform_indices = @transform_3, window_bounds = array<i64: 128, 128>}, {pipeline_mode = #tpu.pipeline_mode<synchronous>, transform_indices = @transform_4, window_bounds = array<i64: 1, 128>}, {pipeline_mode = #tpu.pipeline_mode<synchronous>, transform_indices = @transform_5, window_bounds = array<i64: 128, 128>}, {pipeline_mode = #tpu.pipeline_mode<synchronous>, transform_indices = @transform_6, window_bounds = array<i64: 1, 128>}, {transform_indices = @transform_7, window_bounds = array<i64: 64, 128>}]} {
    %c0 = arith.constant 0 : index
    %c0_0 = arith.constant 0 : index
    %0 = vector.load %arg1[%c0, %c0_0] : memref<64x8xf32, #tpu.memory_space<vmem>>, vector<64x8xf32>
    %c0_1 = arith.constant 0 : index
    %c0_2 = arith.constant 0 : index
    %1 = vector.load %arg2[%c0_1, %c0_2] : memref<8x128xf32, #tpu.memory_space<vmem>>, vector<8x128xf32>
    %cst = arith.constant dense<0.000000e+00> : vector<64x128xf32>
    %2 = tpu.matmul %0, %1, %cst {dimension_numbers = #tpu.dot_dimension_numbers<[1], [0], [0], [1], [0, 0, 1, 1], [], []>} : vector<64x8xf32>, vector<8x128xf32>, vector<64x128xf32> -> vector<64x128xf32>
    %c0_3 = arith.constant 0 : index
    %c0_4 = arith.constant 0 : index
    %3 = vector.load %arg3[%c0_3, %c0_4] : memref<1x128xf32, #tpu.memory_space<vmem>>, vector<1x128xf32>
    %4 = vector.broadcast %3 : vector<1x128xf32> to vector<64x128xf32>
    %5 = arith.addf %2, %4 : vector<64x128xf32>
    %cst_5 = arith.constant 0.000000e+00 : f32
    %6 = vector.broadcast %cst_5 : f32 to vector<64x128xf32>
    %7 = arith.maximumf %5, %6 : vector<64x128xf32>
    %c0_6 = arith.constant 0 : index
    %c0_7 = arith.constant 0 : index
    %8 = vector.load %arg4[%c0_6, %c0_7] : memref<128x128xf32, #tpu.memory_space<vmem>>, vector<128x128xf32>
    %cst_8 = arith.constant dense<0.000000e+00> : vector<64x128xf32>
    %9 = tpu.matmul %7, %8, %cst_8 {dimension_numbers = #tpu.dot_dimension_numbers<[1], [0], [0], [1], [0, 0, 1, 1], [], []>} : vector<64x128xf32>, vector<128x128xf32>, vector<64x128xf32> -> vector<64x128xf32>
    %c0_9 = arith.constant 0 : index
    %c0_10 = arith.constant 0 : index
    %10 = vector.load %arg5[%c0_9, %c0_10] : memref<1x128xf32, #tpu.memory_space<vmem>>, vector<1x128xf32>
    %11 = vector.broadcast %10 : vector<1x128xf32> to vector<64x128xf32>
    %12 = arith.addf %9, %11 : vector<64x128xf32>
    %cst_11 = arith.constant 0.000000e+00 : f32
    %13 = vector.broadcast %cst_11 : f32 to vector<64x128xf32>
    %14 = arith.maximumf %12, %13 : vector<64x128xf32>
    %c0_12 = arith.constant 0 : index
    %c0_13 = arith.constant 0 : index
    %15 = vector.load %arg6[%c0_12, %c0_13] : memref<128x128xf32, #tpu.memory_space<vmem>>, vector<128x128xf32>
    %cst_14 = arith.constant dense<0.000000e+00> : vector<64x128xf32>
    %16 = tpu.matmul %14, %15, %cst_14 {dimension_numbers = #tpu.dot_dimension_numbers<[1], [0], [0], [1], [0, 0, 1, 1], [], []>} : vector<64x128xf32>, vector<128x128xf32>, vector<64x128xf32> -> vector<64x128xf32>
    %c0_15 = arith.constant 0 : index
    %c0_16 = arith.constant 0 : index
    %17 = vector.load %arg7[%c0_15, %c0_16] : memref<1x128xf32, #tpu.memory_space<vmem>>, vector<1x128xf32>
    %18 = vector.broadcast %17 : vector<1x128xf32> to vector<64x128xf32>
    %19 = arith.addf %16, %18 : vector<64x128xf32>
    %c0_17 = arith.constant 0 : index
    %c0_18 = arith.constant 0 : index
    %20 = vector.load %arg8[%c0_17, %c0_18] : memref<64x128xf32, #tpu.memory_space<vmem>>, vector<64x128xf32>
    tpu.vector_store %arg8[%c0_17, %c0_18], %19 {strides = array<i32>} : memref<64x128xf32, #tpu.memory_space<vmem>>, vector<64x128xf32>,
    return
  }
  func.func @transform_0(%arg0: i32) -> (i32, i32) {
    %c0_i32 = arith.constant 0 : i32
    %c0_i32_0 = arith.constant 0 : i32
    return %arg0, %c0_i32 : i32, i32
  }
  func.func @transform_1(%arg0: i32) -> (i32, i32) {
    %c0_i32 = arith.constant 0 : i32
    %c0_i32_0 = arith.constant 0 : i32
    %c0_i32_1 = arith.constant 0 : i32
    return %c0_i32, %c0_i32_0 : i32, i32
  }
  func.func @transform_2(%arg0: i32) -> (i32, i32) {
    %c0_i32 = arith.constant 0 : i32
    %c0_i32_0 = arith.constant 0 : i32
    %c0_i32_1 = arith.constant 0 : i32
    return %c0_i32, %c0_i32_0 : i32, i32
  }
  func.func @transform_3(%arg0: i32) -> (i32, i32) {
    %c0_i32 = arith.constant 0 : i32
    %c0_i32_0 = arith.constant 0 : i32
    %c0_i32_1 = arith.constant 0 : i32
    return %c0_i32, %c0_i32_0 : i32, i32
  }
  func.func @transform_4(%arg0: i32) -> (i32, i32) {
    %c0_i32 = arith.constant 0 : i32
    %c0_i32_0 = arith.constant 0 : i32
    %c0_i32_1 = arith.constant 0 : i32
    return %c0_i32, %c0_i32_0 : i32, i32
  }
  func.func @transform_5(%arg0: i32) -> (i32, i32) {
    %c0_i32 = arith.constant 0 : i32
    %c0_i32_0 = arith.constant 0 : i32
    %c0_i32_1 = arith.constant 0 : i32
    return %c0_i32, %c0_i32_0 : i32, i32
  }
  func.func @transform_6(%arg0: i32) -> (i32, i32) {
    %c0_i32 = arith.constant 0 : i32
    %c0_i32_0 = arith.constant 0 : i32
    %c0_i32_1 = arith.constant 0 : i32
    return %c0_i32, %c0_i32_0 : i32, i32
  }
  func.func @transform_7(%arg0: i32) -> (i32, i32) {
    %c0_i32 = arith.constant 0 : i32
    %c0_i32_0 = arith.constant 0 : i32
    return %arg0, %c0_i32 : i32, i32
  }
}

</mosaic_0001>

<llo_original>
// kernel: _lambda_.1
$region0: #{_lambda_.1}
  #allocation0 [shape = 'u32[]', space=smem, size = 0x4, offset = 0x4, fixed_abs, tag = 'smem constant byte address 0x4 - core index']
  #allocation1 [shape = 'u32[72,128]{1,0:T(1,128)}', space=vmem, size = 0x9000, scoped, tag = 'internal scratch']
  %s0 = inlined_call_operand.vmem [shape: f32[64,8], index: 0, kind: input, shape index: {}]
  %s1 = inlined_call_operand.vmem [shape: f32[8,128], index: 1, kind: input, shape index: {}]
  %s2 = inlined_call_operand.vmem [shape: f32[1,128], index: 2, kind: input, shape index: {}]
  %s3 = inlined_call_operand.hbm [shape: f32[128,128], index: 3, kind: input, shape index: {}]
  %s4 = inlined_call_operand.vmem [shape: f32[1,128], index: 4, kind: input, shape index: {}]
  %s5 = inlined_call_operand.vmem [shape: f32[128,128], index: 5, kind: input, shape index: {}]
  %s6 = inlined_call_operand.vmem [shape: f32[1,128], index: 6, kind: input, shape index: {}]
  %s7 = inlined_call_operand.vmem [shape: f32[64,128], index: 7, kind: output, shape index: {}]
  %s8 = sld [smem:[#allocation0]]
  $region42: #{_lambda_.1} parent=0
    _
  %s10 = ssub.s32 1, %s8
  %s11 = scalar_select 0, %s10, %s8
  $region1: #{_lambda_.1} parent=0
    #allocation2 [shape = 'u8[65536]{0}', space=vmem, size = 0x10000, scoped, tag = 'input window, operand 3, single buffered']
    #allocation3 [shape = 's32[1]{0}', space=sflag, size = 0x4, scoped, tag = 'scoped memory for _lambda_.1']
    %12 = vsyncpa [#allocation3], 0
    // Predicated region
    $region2: #{_lambda_.1} parent=1 // pred_check
      _
    $region3: #{_lambda_.1} parent=1 // pred_check_branch
      %14 = sbr.rel (0) target = $region5
    $region4: #{_lambda_.1} parent=1 // pred_region
      _
    $region5: #{_lambda_.1} parent=1 // pred_fallthru
      _
    // Predicated region
    $region6: #{_lambda_.1} parent=1 // pred_check
      _
    $region7: #{_lambda_.1} parent=1 // pred_check_branch
      %16 = sbr.rel (0) target = $region9
    $region8: #{_lambda_.1} parent=1 // pred_region
      _
    $region9: #{_lambda_.1} parent=1 // pred_fallthru
      _
    // Predicated region
    $region10: #{_lambda_.1} parent=1 // pred_check
      _
    $region11: #{_lambda_.1} parent=1 // pred_check_branch
      %18 = sbr.rel (0) target = $region13
    $region12: #{_lambda_.1} parent=1 // pred_region
      _
    $region13: #{_lambda_.1} parent=1 // pred_fallthru
      _
    // Predicated region
    $region14: #{_lambda_.1} parent=1 // pred_check
      _
    $region15: #{_lambda_.1} parent=1 // pred_check_branch
      %20 = sbr.rel (0) target = $region17
    $region16: #{_lambda_.1} parent=1 // pred_region
      %22 = vsyncadd [#allocation3], 0
      %s23 = sshll.u32 %s3, 4
      %s24 = int_to_ptr.hbm [resolvable:$true] %s23
      %s25 = sshll.u32 [#allocation2], 4
      %s26 = int_to_ptr.vmem [resolvable:$true] %s25
      %31 = dma.hbm_to_vmem [thread:$0]  %s24, 2048, %s26, [#allocation3], 128, 128, 8
    $region17: #{_lambda_.1} parent=1 // pred_fallthru
      _
    // Predicated region
    $region18: #{_lambda_.1} parent=1 // pred_check
      _
    $region19: #{_lambda_.1} parent=1 // pred_check_branch
      %33 = sbr.rel (0) target = $region21
    $region20: #{_lambda_.1} parent=1 // pred_region
      _
    $region21: #{_lambda_.1} parent=1 // pred_fallthru
      _
    // Predicated region
    $region22: #{_lambda_.1} parent=1 // pred_check
      _
    $region23: #{_lambda_.1} parent=1 // pred_check_branch
      %35 = sbr.rel (0) target = $region25
    $region24: #{_lambda_.1} parent=1 // pred_region
      _
    $region25: #{_lambda_.1} parent=1 // pred_fallthru
      _
    // Predicated region
    $region26: #{_lambda_.1} parent=1 // pred_check
      _
    $region27: #{_lambda_.1} parent=1 // pred_check_branch
      %37 = sbr.rel (0) target = $region29
    $region28: #{_lambda_.1} parent=1 // pred_region
      _
    $region29: #{_lambda_.1} parent=1 // pred_fallthru
      _
    // Predicated region
    $region30: #{_lambda_.1} parent=1 // pred_check
      _
    $region31: #{_lambda_.1} parent=1 // pred_check_branch
      %39 = sbr.rel (0) target = $region33
    $region32: #{_lambda_.1} parent=1 // pred_region
      %41 = dma.done [#allocation3], 2048
    $region33: #{_lambda_.1} parent=1 // pred_fallthru
      _
    %v42 = vld [vmem:[%s0] sm:$0xff]
    %v43 = vld [vmem:[%s0 + $0x8] sm:$0xff]
    %v44 = vld [vmem:[%s0 + $0x10] sm:$0xff]
    %v45 = vld [vmem:[%s0 + $0x18] sm:$0xff]
    %v46 = vld [vmem:[%s0 + $0x20] sm:$0xff]
    %v47 = vld [vmem:[%s0 + $0x28] sm:$0xff]
    %v48 = vld [vmem:[%s0 + $0x30] sm:$0xff]
    %v49 = vld [vmem:[%s0 + $0x38] sm:$0xff]
    %v50 = vld [vmem:[%s1] sm:$0xff]
    %v51 = vld [vmem:[%s2] sm:$0x1]
    %v53 = vperm.slane %v51, 0
    %vm55 = vcmask 64512
    %v57 = vsel %vm55, %v42, 0
    %v60 = vsel %vm55, %v43, 0
    %v63 = vsel %vm55, %v44, 0
    %v66 = vsel %vm55, %v45, 0
    %v69 = vsel %vm55, %v46, 0
    %v72 = vsel %vm55, %v47, 0
    %v75 = vsel %vm55, %v48, 0
    %v78 = vsel %vm55, %v49, 0
    %80 = vmatpush.msra.mxu0 0.0
    %81 = vmatpush.msra.mxu0 0.0
    %82 = vmatpush.msra.mxu0 0.0
    %83 = vmatpush.msra.mxu0 0.0
    %84 = vmatpush.msra.mxu0 0.0
    %85 = vmatpush.msra.mxu0 0.0
    %86 = vmatpush.msra.mxu0 0.0
    %87 = vmatpush.msra.mxu0 0.0
    %88 = vmatpush.msra.mxu0 0.0
    %89 = vmatpush.msra.mxu0 0.0
    %90 = vmatpush.msra.mxu0 0.0
    %91 = vmatpush.msra.mxu0 0.0
    %92 = vmatpush.msra.mxu0 0.0
    %93 = vmatpush.msra.mxu0 0.0
    %94 = vmatpush.msra.mxu0 0.0
    %95 = vmatpush.msra.mxu0 %v50
    %96 = vmatmul.f32.gmra.mxu0 %v57
    %v97 = vpop.f32.mrf.mxu0
    %v98 = vadd.f32 %v53, %v97
    %99 = vmatmul.f32.gmra.mxu0 %v60
    %v100 = vpop.f32.mrf.mxu0
    %v101 = vadd.f32 %v53, %v100
    %102 = vmatmul.f32.gmra.mxu0 %v63
    %v103 = vpop.f32.mrf.mxu0
    %v104 = vadd.f32 %v53, %v103
    %105 = vmatmul.f32.gmra.mxu0 %v66
    %v106 = vpop.f32.mrf.mxu0
    %v107 = vadd.f32 %v53, %v106
    %108 = vmatmul.f32.gmra.mxu0 %v69
    %v109 = vpop.f32.mrf.mxu0
    %v110 = vadd.f32 %v53, %v109
    %111 = vmatmul.f32.gmra.mxu0 %v72
    %v112 = vpop.f32.mrf.mxu0
    %v113 = vadd.f32 %v53, %v112
    %114 = vmatmul.f32.gmra.mxu0 %v75
    %v115 = vpop.f32.mrf.mxu0
    %v116 = vadd.f32 %v53, %v115
    %117 = vmatmul.f32.gmra.mxu0 %v78
    %v118 = vpop.f32.mrf.mxu0
    %v119 = vadd.f32 %v53, %v118
    %120 = vdwg.mxu0
    %v121 = vmax.f32 %v98, 0.0
    %v122 = vmax.f32 %v101, 0.0
    %v123 = vmax.f32 %v104, 0.0
    %v124 = vmax.f32 %v107, 0.0
    %v125 = vmax.f32 %v110, 0.0
    %v126 = vmax.f32 %v113, 0.0
    %v127 = vmax.f32 %v116, 0.0
    %v128 = vmax.f32 %v119, 0.0
    %v129 = vld [vmem:[#allocation2] sm:$0xff]
    %v130 = vld [vmem:[#allocation2 + $0x8] sm:$0xff]
    %v131 = vld [vmem:[#allocation2 + $0x10] sm:$0xff]
    %v132 = vld [vmem:[#allocation2 + $0x18] sm:$0xff]
    %v133 = vld [vmem:[#allocation2 + $0x20] sm:$0xff]
    %v134 = vld [vmem:[#allocation2 + $0x28] sm:$0xff]
    %v135 = vld [vmem:[#allocation2 + $0x30] sm:$0xff]
    %v136 = vld [vmem:[#allocation2 + $0x38] sm:$0xff]
    %v137 = vld [vmem:[#allocation2 + $0x40] sm:$0xff]
    %v138 = vld [vmem:[#allocation2 + $0x48] sm:$0xff]
    %v139 = vld [vmem:[#allocation2 + $0x50] sm:$0xff]
    %v140 = vld [vmem:[#allocation2 + $0x58] sm:$0xff]
    %v141 = vld [vmem:[#allocation2 + $0x60] sm:$0xff]
    %v142 = vld [vmem:[#allocation2 + $0x68] sm:$0xff]
    %v143 = vld [vmem:[#allocation2 + $0x70] sm:$0xff]
    %v144 = vld [vmem:[#allocation2 + $0x78] sm:$0xff]
    %v145 = vld [vmem:[%s4] sm:$0x1]
    %v147 = vperm.slane %v145, 0
    %149 = vmatpush.msra.mxu0 %v144
    %150 = vmatpush.msra.mxu0 %v143
    %151 = vmatpush.msra.mxu0 %v142
    %152 = vmatpush.msra.mxu0 %v141
    %153 = vmatpush.msra.mxu0 %v140
    %154 = vmatpush.msra.mxu0 %v139
    %155 = vmatpush.msra.mxu0 %v138
    %156 = vmatpush.msra.mxu0 %v137
    %157 = vmatpush.msra.mxu0 %v136
    %158 = vmatpush.msra.mxu0 %v135
    %159 = vmatpush.msra.mxu0 %v134
    %160 = vmatpush.msra.mxu0 %v133
    %161 = vmatpush.msra.mxu0 %v132
    %162 = vmatpush.msra.mxu0 %v131
    %163 = vmatpush.msra.mxu0 %v130
    %164 = vmatpush.msra.mxu0 %v129
    %165 = vmatmul.f32.gmra.mxu0 %v121
    %v166 = vpop.f32.mrf.mxu0
    %v167 = vadd.f32 %v147, %v166
    %168 = vmatmul.f32.gmra.mxu0 %v122
    %v169 = vpop.f32.mrf.mxu0
    %v170 = vadd.f32 %v147, %v169
    %171 = vmatmul.f32.gmra.mxu0 %v123
    %v172 = vpop.f32.mrf.mxu0
    %v173 = vadd.f32 %v147, %v172
    %174 = vmatmul.f32.gmra.mxu0 %v124
    %v175 = vpop.f32.mrf.mxu0
    %v176 = vadd.f32 %v147, %v175
    %177 = vmatmul.f32.gmra.mxu0 %v125
    %v178 = vpop.f32.mrf.mxu0
    %v179 = vadd.f32 %v147, %v178
    %180 = vmatmul.f32.gmra.mxu0 %v126
    %v181 = vpop.f32.mrf.mxu0
    %v182 = vadd.f32 %v147, %v181
    %183 = vmatmul.f32.gmra.mxu0 %v127
    %v184 = vpop.f32.mrf.mxu0
    %v185 = vadd.f32 %v147, %v184
    %186 = vmatmul.f32.gmra.mxu0 %v128
    %v187 = vpop.f32.mrf.mxu0
    %v188 = vadd.f32 %v147, %v187
    %189 = vdwg.mxu0
    %v190 = vmax.f32 %v167, 0.0
    %v191 = vmax.f32 %v170, 0.0
    %v192 = vmax.f32 %v173, 0.0
    %v193 = vmax.f32 %v176, 0.0
    %v194 = vmax.f32 %v179, 0.0
    %v195 = vmax.f32 %v182, 0.0
    %v196 = vmax.f32 %v185, 0.0
    %v197 = vmax.f32 %v188, 0.0
    %v198 = vld [vmem:[%s5] sm:$0xff]
    %v199 = vld [vmem:[%s5 + $0x8] sm:$0xff]
    %v200 = vld [vmem:[%s5 + $0x10] sm:$0xff]
    %v201 = vld [vmem:[%s5 + $0x18] sm:$0xff]
    %v202 = vld [vmem:[%s5 + $0x20] sm:$0xff]
    %v203 = vld [vmem:[%s5 + $0x28] sm:$0xff]
    %v204 = vld [vmem:[%s5 + $0x30] sm:$0xff]
    %v205 = vld [vmem:[%s5 + $0x38] sm:$0xff]
    %v206 = vld [vmem:[%s5 + $0x40] sm:$0xff]
    %v207 = vld [vmem:[%s5 + $0x48] sm:$0xff]
    %v208 = vld [vmem:[%s5 + $0x50] sm:$0xff]
    %v209 = vld [vmem:[%s5 + $0x58] sm:$0xff]
    %v210 = vld [vmem:[%s5 + $0x60] sm:$0xff]
    %v211 = vld [vmem:[%s5 + $0x68] sm:$0xff]
    %v212 = vld [vmem:[%s5 + $0x70] sm:$0xff]
    %v213 = vld [vmem:[%s5 + $0x78] sm:$0xff]
    %v214 = vld [vmem:[%s6] sm:$0x1]
    %v216 = vperm.slane %v214, 0
    %218 = vmatpush.msra.mxu0 %v213
    %219 = vmatpush.msra.mxu0 %v212
    %220 = vmatpush.msra.mxu0 %v211
    %221 = vmatpush.msra.mxu0 %v210
    %222 = vmatpush.msra.mxu0 %v209
    %223 = vmatpush.msra.mxu0 %v208
    %224 = vmatpush.msra.mxu0 %v207
    %225 = vmatpush.msra.mxu0 %v206
    %226 = vmatpush.msra.mxu0 %v205
    %227 = vmatpush.msra.mxu0 %v204
    %228 = vmatpush.msra.mxu0 %v203
    %229 = vmatpush.msra.mxu0 %v202
    %230 = vmatpush.msra.mxu0 %v201
    %231 = vmatpush.msra.mxu0 %v200
    %232 = vmatpush.msra.mxu0 %v199
    %233 = vmatpush.msra.mxu0 %v198
    %234 = vmatmul.f32.gmra.mxu0 %v190
    %v235 = vpop.f32.mrf.mxu0
    %v236 = vadd.f32 %v216, %v235
    %237 = vmatmul.f32.gmra.mxu0 %v191
    %v238 = vpop.f32.mrf.mxu0
    %v239 = vadd.f32 %v216, %v238
    %240 = vmatmul.f32.gmra.mxu0 %v192
    %v241 = vpop.f32.mrf.mxu0
    %v242 = vadd.f32 %v216, %v241
    %243 = vmatmul.f32.gmra.mxu0 %v193
    %v244 = vpop.f32.mrf.mxu0
    %v245 = vadd.f32 %v216, %v244
    %246 = vmatmul.f32.gmra.mxu0 %v194
    %v247 = vpop.f32.mrf.mxu0
    %v248 = vadd.f32 %v216, %v247
    %249 = vmatmul.f32.gmra.mxu0 %v195
    %v250 = vpop.f32.mrf.mxu0
    %v251 = vadd.f32 %v216, %v250
    %252 = vmatmul.f32.gmra.mxu0 %v196
    %v253 = vpop.f32.mrf.mxu0
    %v254 = vadd.f32 %v216, %v253
    %255 = vmatmul.f32.gmra.mxu0 %v197
    %v256 = vpop.f32.mrf.mxu0
    %v257 = vadd.f32 %v216, %v256
    %258 = vdwg.mxu0
    %259 = vst [vmem:[%s7] sm:$0xff] %v236
    %260 = vst [vmem:[%s7 + $0x8] sm:$0xff] %v239
    %261 = vst [vmem:[%s7 + $0x10] sm:$0xff] %v242
    %262 = vst [vmem:[%s7 + $0x18] sm:$0xff] %v245
    %263 = vst [vmem:[%s7 + $0x20] sm:$0xff] %v248
    %264 = vst [vmem:[%s7 + $0x28] sm:$0xff] %v251
    %265 = vst [vmem:[%s7 + $0x30] sm:$0xff] %v254
    %266 = vst [vmem:[%s7 + $0x38] sm:$0xff] %v257
    // Predicated region
    $region34: #{_lambda_.1} parent=1 // pred_check
      _
    $region35: #{_lambda_.1} parent=1 // pred_check_branch
      %268 = sbr.rel (0) target = $region37
    $region36: #{_lambda_.1} parent=1 // pred_region
      _
    $region37: #{_lambda_.1} parent=1 // pred_fallthru
      _
    // Predicated region
    $region38: #{_lambda_.1} parent=1 // pred_check
      _
    $region39: #{_lambda_.1} parent=1 // pred_check_branch
      %270 = sbr.rel (0) target = $region41
    $region40: #{_lambda_.1} parent=1 // pred_region
      _
    $region41: #{_lambda_.1} parent=1 // pred_fallthru
      _
    %271 = vsyncpa [#allocation3], 1

</llo_original>
